<compile_context>
chip_gen: v5e
topology: v5e:2x2
jax: 0.10.0
libtpu: 0.0.40
codegen_flags: <defaults>
</compile_context>

<pallas_src>
import functools

import jax
import jax.numpy as jnp
import numpy as np
from jax import lax
from jax.experimental import pallas as pl
from jax.experimental.pallas import tpu as pltpu

_LANE = 128
_TILE_BUDGET_BYTES = 16 * 1024 * 1024   # double-buffered in+out spatial tiles
_VMEM_LIMIT_BYTES = 32 * 1024 * 1024    # explicit scoped-VMEM limit; safe on
                                        # v5e/v6e (128 MiB) and v7x (64 MiB)


def _pool_bounds(c: int, o: int):
    """PyTorch AdaptiveAvgPool1d bins: [floor(i*c/o), ceil((i+1)*c/o))."""
    bounds = []
    for i in range(o):
        s = (i * c) // o
        e = -((-(i + 1) * c) // o)
        bounds.append((s, e))
    return bounds


def _pool_matrix(c: int, o: int, *, bin_axis: int, shape):
    """Adaptive-avg-pool weight matrix built from iota/compare/select only
    (safe to lower inside a Pallas kernel; no dense constants needed)."""
    bins = lax.broadcasted_iota(jnp.int32, shape, bin_axis)
    chans = lax.broadcasted_iota(jnp.int32, shape, 1 - bin_axis)
    m = jnp.zeros(shape, jnp.float32)
    for i, (s, e) in enumerate(_pool_bounds(c, o)):
        w = 1.0 / float(e - s)
        m = m + jnp.where((bins == i) & (chans >= s) & (chans < e), w, 0.0)
    return m


def _hsi_avg_kernel(c, o, hsi_ref, wl_ref, hsi_out_ref, wl_out_ref):
    # hsi_ref: (C, T) spatial tile of one batch's (C, H*W) slab (lanes = HW)
    # wl_ref:  (1, C) that batch's wavelength row (resident across HW tiles)
    # hsi_out_ref: (O, T); wl_out_ref: (1, O)
    # Pool matrices are a handful of vreg ops per grid step — negligible next
    # to the streamed (C, T) tile, and cheaper than an extra input DMA pair.
    pool_t = _pool_matrix(c, o, bin_axis=0, shape=(o, c))     # (O, C)

    x = hsi_ref[...]                                          # (C, T)
    hsi_out_ref[...] = jnp.dot(
        pool_t.astype(x.dtype), x, preferred_element_type=jnp.float32
    ).astype(hsi_out_ref.dtype)

    # Wavelength pooling fused into the same kernel (no second launch).  The
    # value is identical for every spatial tile, so rewriting it each step is
    # idempotent and megacore-safe regardless of how the grid is split.
    pool = _pool_matrix(c, o, bin_axis=1, shape=(c, o))       # (C, O)
    wl = wl_ref[...]                                          # (1, C)
    wl_out_ref[...] = jnp.dot(
        wl, pool.astype(wl.dtype), preferred_element_type=jnp.float32
    ).astype(wl_out_ref.dtype)


def _pick_tile_hw(hw: int, c: int, o: int, itemsize: int, batch: int) -> int:
    """Largest multiple-of-128 spatial tile whose double-buffered
    (C, tile) input + (O, tile) output blocks fit _TILE_BUDGET_BYTES, while
    keeping >= 2 spatial grid steps when the batch axis alone cannot feed both
    v7x TensorCores."""
    if hw <= _LANE:
        return hw                                  # block == full (tiny) extent
    per_lane = 2 * (c * itemsize + o * max(itemsize, 4))   # 2x = double buffer
    tile = (_TILE_BUDGET_BYTES // max(per_lane, 1)) // _LANE * _LANE
    min_steps = 2 if batch < 2 else 1
    cap = max(_LANE, (hw // (_LANE * min_steps)) * _LANE)
    return max(_LANE, min(tile, cap))


def hsi_avg(hsi: jnp.ndarray, wavelengths: jnp.ndarray, output_size: int):
    """Forward pass of _HSIAvg. hsi: (B, C, H, W) NCHW; wavelengths: (B, C)."""
    b, c, h, w = hsi.shape
    o = output_size
    hw = h * w
    itemsize = jnp.dtype(hsi.dtype).itemsize
    wl_itemsize = jnp.dtype(wavelengths.dtype).itemsize

    x = hsi.reshape(b, c, hw)                 # contiguous view — no HBM transpose
    wl = wavelengths.reshape(b, 1, c)

    tile = _pick_tile_hw(hw, c, o, itemsize, b)
    grid = (b, pl.cdiv(hw, tile))

    kernel = functools.partial(_hsi_avg_kernel, c, o)

    hsi_flat, wl_out = pl.pallas_call(
        kernel,
        out_shape=(
            jax.ShapeDtypeStruct((b, o, hw), hsi.dtype),
            jax.ShapeDtypeStruct((b, 1, o), wavelengths.dtype),
        ),
        grid=grid,
        in_specs=[
            # Batch dim squeezed; kernel sees (C, tile) with HW on the lanes.
            pl.BlockSpec((None, c, tile), lambda bi, ti: (bi, 0, ti)),
            # Wavelength row: resident across all spatial tiles of a batch.
            pl.BlockSpec((None, 1, c), lambda bi, ti: (bi, 0, 0)),
        ],
        out_specs=(
            pl.BlockSpec((None, o, tile), lambda bi, ti: (bi, 0, ti)),
            pl.BlockSpec((None, 1, o), lambda bi, ti: (bi, 0, 0)),
        ),
        compiler_params=pltpu.CompilerParams(
            dimension_semantics=("parallel", "parallel"),
            vmem_limit_bytes=_VMEM_LIMIT_BYTES,
        ),
        cost_estimate=pl.CostEstimate(
            flops=2 * b * hw * c * o + 2 * b * c * o,
            transcendentals=0,
            bytes_accessed=(b * hw * (c + o) * itemsize
                            + b * (c + o) * wl_itemsize),
        ),
    )(x, wl)

    return hsi_flat.reshape(b, o, h, w), wl_out.reshape(b, o)


def _reference(hsi, wavelengths, output_size):
    """Pure-numpy reference of PyTorch AdaptiveAvgPool1d semantics."""
    hsi = np.asarray(hsi)
    wl = np.asarray(wavelengths)
    b, c, h, w = hsi.shape
    x = hsi.transpose(0, 2, 3, 1).reshape(b, h * w, c)
    out = np.zeros((b, h * w, output_size), dtype=np.float32)
    wl_out = np.zeros((b, output_size), dtype=np.float32)
    for i in range(output_size):
        s = (i * c) // output_size
        e = -((-(i + 1) * c) // output_size)
        out[:, :, i] = x[:, :, s:e].mean(axis=-1)
        wl_out[:, i] = wl[:, s:e].mean(axis=-1)
    hsi_out = out.reshape(b, h, w, output_size).transpose(0, 3, 1, 2)
    return hsi_out, wl_out


if __name__ == "__main__":
    B, C, H, W = 2, 8, 16, 16
    OUTPUT_SIZE = 3  # uneven bins (8 -> 3) exercise the floor/ceil boundaries

    key = jax.random.PRNGKey(0)
    k1, k2 = jax.random.split(key)
    hsi = jax.random.normal(k1, (B, C, H, W), dtype=jnp.float32)
    wavelengths = jax.random.uniform(k2, (B, C), dtype=jnp.float32) * 1000.0

    hsi_out, wl_out = hsi_avg(hsi, wavelengths, OUTPUT_SIZE)
    jax.block_until_ready((hsi_out, wl_out))

    ref_hsi, ref_wl = _reference(hsi, wavelengths, OUTPUT_SIZE)
    assert hsi_out.shape == (B, OUTPUT_SIZE, H, W)
    assert wl_out.shape == (B, OUTPUT_SIZE)
    np.testing.assert_allclose(np.asarray(hsi_out), ref_hsi, rtol=1e-5, atol=1e-5)
    np.testing.assert_allclose(np.asarray(wl_out), ref_wl, rtol=1e-5, atol=1e-4)

    print("KERNEL_OK")
</pallas_src>

<mosaic_0001>
module attributes {stable_mosaic.version = 11 : i64} {
  func.func @_hsi_avg_kernel(%arg0: i32, %arg1: i32, %arg2: memref<1x8x256xf32, #tpu.memory_space<vmem>>, %arg3: memref<1x1x8xf32, #tpu.memory_space<vmem>>, %arg4: memref<1x3x256xf32, #tpu.memory_space<vmem>>, %arg5: memref<1x1x3xf32, #tpu.memory_space<vmem>>) attributes {dimension_semantics = [#tpu.dimension_semantics<parallel>, #tpu.dimension_semantics<parallel>], iteration_bounds = array<i64: 2, 1>, scalar_prefetch = 0 : i64, scratch_operands = 0 : i64, tpu.core_type = #tpu.core_type<tc>, window_params = [{transform_indices = @transform_0, window_bounds = array<i64: 1, 8, 256>}, {transform_indices = @transform_1, window_bounds = array<i64: 1, 1, 8>}, {transform_indices = @transform_2, window_bounds = array<i64: 1, 3, 256>}, {transform_indices = @transform_3, window_bounds = array<i64: 1, 1, 3>}]} {
    %0 = tpu.iota {dimensions = array<i32: 0>} : vector<3x8xi32>
    %1 = tpu.iota {dimensions = array<i32: 1>} : vector<3x8xi32>
    %cst = arith.constant 0.000000e+00 : f32
    %2 = vector.broadcast %cst : f32 to vector<3x8xf32>
    %c0_i32 = arith.constant 0 : i32
    %3 = vector.broadcast %c0_i32 : i32 to vector<3x8xi32>
    %4 = arith.cmpi eq, %0, %3 : vector<3x8xi32>
    %c0_i32_0 = arith.constant 0 : i32
    %5 = vector.broadcast %c0_i32_0 : i32 to vector<3x8xi32>
    %6 = arith.cmpi sge, %1, %5 : vector<3x8xi32>
    %7 = arith.andi %4, %6 : vector<3x8xi1>
    %c3_i32 = arith.constant 3 : i32
    %8 = vector.broadcast %c3_i32 : i32 to vector<3x8xi32>
    %9 = arith.cmpi slt, %1, %8 : vector<3x8xi32>
    %10 = arith.andi %7, %9 : vector<3x8xi1>
    %cst_1 = arith.constant 0.333333343 : f32
    %cst_2 = arith.constant 0.000000e+00 : f32
    %11 = vector.broadcast %cst_1 : f32 to vector<3x8xf32>
    %12 = vector.broadcast %cst_2 : f32 to vector<3x8xf32>
    %13 = arith.select %10, %11, %12 : vector<3x8xi1>, vector<3x8xf32>
    %14 = arith.addf %2, %13 : vector<3x8xf32>
    %c1_i32 = arith.constant 1 : i32
    %15 = vector.broadcast %c1_i32 : i32 to vector<3x8xi32>
    %16 = arith.cmpi eq, %0, %15 : vector<3x8xi32>
    %c2_i32 = arith.constant 2 : i32
    %17 = vector.broadcast %c2_i32 : i32 to vector<3x8xi32>
    %18 = arith.cmpi sge, %1, %17 : vector<3x8xi32>
    %19 = arith.andi %16, %18 : vector<3x8xi1>
    %c6_i32 = arith.constant 6 : i32
    %20 = vector.broadcast %c6_i32 : i32 to vector<3x8xi32>
    %21 = arith.cmpi slt, %1, %20 : vector<3x8xi32>
    %22 = arith.andi %19, %21 : vector<3x8xi1>
    %cst_3 = arith.constant 2.500000e-01 : f32
    %cst_4 = arith.constant 0.000000e+00 : f32
    %23 = vector.broadcast %cst_3 : f32 to vector<3x8xf32>
    %24 = vector.broadcast %cst_4 : f32 to vector<3x8xf32>
    %25 = arith.select %22, %23, %24 : vector<3x8xi1>, vector<3x8xf32>
    %26 = arith.addf %14, %25 : vector<3x8xf32>
    %c2_i32_5 = arith.constant 2 : i32
    %27 = vector.broadcast %c2_i32_5 : i32 to vector<3x8xi32>
    %28 = arith.cmpi eq, %0, %27 : vector<3x8xi32>
    %c5_i32 = arith.constant 5 : i32
    %29 = vector.broadcast %c5_i32 : i32 to vector<3x8xi32>
    %30 = arith.cmpi sge, %1, %29 : vector<3x8xi32>
    %31 = arith.andi %28, %30 : vector<3x8xi1>
    %c8_i32 = arith.constant 8 : i32
    %32 = vector.broadcast %c8_i32 : i32 to vector<3x8xi32>
    %33 = arith.cmpi slt, %1, %32 : vector<3x8xi32>
    %34 = arith.andi %31, %33 : vector<3x8xi1>
    %cst_6 = arith.constant 0.333333343 : f32
    %cst_7 = arith.constant 0.000000e+00 : f32
    %35 = vector.broadcast %cst_6 : f32 to vector<3x8xf32>
    %36 = vector.broadcast %cst_7 : f32 to vector<3x8xf32>
    %37 = arith.select %34, %35, %36 : vector<3x8xi1>, vector<3x8xf32>
    %38 = arith.addf %26, %37 : vector<3x8xf32>
    %c0 = arith.constant 0 : index
    %c0_8 = arith.constant 0 : index
    %c0_9 = arith.constant 0 : index
    %39 = vector.load %arg2[%c0, %c0_8, %c0_9] : memref<1x8x256xf32, #tpu.memory_space<vmem>>, vector<1x8x256xf32>
    %40 = vector.shape_cast %39 : vector<1x8x256xf32> to vector<8x256xf32>
    %cst_10 = arith.constant dense<0.000000e+00> : vector<3x256xf32>
    %41 = tpu.matmul %38, %40, %cst_10 {dimension_numbers = #tpu.dot_dimension_numbers<[1], [0], [0], [1], [0, 0, 1, 1], [], []>} : vector<3x8xf32>, vector<8x256xf32>, vector<3x256xf32> -> vector<3x256xf32>
    %c0_11 = arith.constant 0 : index
    %c0_12 = arith.constant 0 : index
    %c0_13 = arith.constant 0 : index
    %42 = vector.load %arg4[%c0_11, %c0_12, %c0_13] : memref<1x3x256xf32, #tpu.memory_space<vmem>>, vector<1x3x256xf32>
    %43 = vector.shape_cast %42 : vector<1x3x256xf32> to vector<3x256xf32>
    %44 = vector.shape_cast %41 : vector<3x256xf32> to vector<1x3x256xf32>
    tpu.vector_store %arg4[%c0_11, %c0_12, %c0_13], %44 {strides = array<i32>} : memref<1x3x256xf32, #tpu.memory_space<vmem>>, vector<1x3x256xf32>,
    %45 = tpu.iota {dimensions = array<i32: 1>} : vector<8x3xi32>
    %46 = tpu.iota {dimensions = array<i32: 0>} : vector<8x3xi32>
    %cst_14 = arith.constant 0.000000e+00 : f32
    %47 = vector.broadcast %cst_14 : f32 to vector<8x3xf32>
    %c0_i32_15 = arith.constant 0 : i32
    %48 = vector.broadcast %c0_i32_15 : i32 to vector<8x3xi32>
    %49 = arith.cmpi eq, %45, %48 : vector<8x3xi32>
    %c0_i32_16 = arith.constant 0 : i32
    %50 = vector.broadcast %c0_i32_16 : i32 to vector<8x3xi32>
    %51 = arith.cmpi sge, %46, %50 : vector<8x3xi32>
    %52 = arith.andi %49, %51 : vector<8x3xi1>
    %c3_i32_17 = arith.constant 3 : i32
    %53 = vector.broadcast %c3_i32_17 : i32 to vector<8x3xi32>
    %54 = arith.cmpi slt, %46, %53 : vector<8x3xi32>
    %55 = arith.andi %52, %54 : vector<8x3xi1>
    %cst_18 = arith.constant 0.333333343 : f32
    %cst_19 = arith.constant 0.000000e+00 : f32
    %56 = vector.broadcast %cst_18 : f32 to vector<8x3xf32>
    %57 = vector.broadcast %cst_19 : f32 to vector<8x3xf32>
    %58 = arith.select %55, %56, %57 : vector<8x3xi1>, vector<8x3xf32>
    %59 = arith.addf %47, %58 : vector<8x3xf32>
    %c1_i32_20 = arith.constant 1 : i32
    %60 = vector.broadcast %c1_i32_20 : i32 to vector<8x3xi32>
    %61 = arith.cmpi eq, %45, %60 : vector<8x3xi32>
    %c2_i32_21 = arith.constant 2 : i32
    %62 = vector.broadcast %c2_i32_21 : i32 to vector<8x3xi32>
    %63 = arith.cmpi sge, %46, %62 : vector<8x3xi32>
    %64 = arith.andi %61, %63 : vector<8x3xi1>
    %c6_i32_22 = arith.constant 6 : i32
    %65 = vector.broadcast %c6_i32_22 : i32 to vector<8x3xi32>
    %66 = arith.cmpi slt, %46, %65 : vector<8x3xi32>
    %67 = arith.andi %64, %66 : vector<8x3xi1>
    %cst_23 = arith.constant 2.500000e-01 : f32
    %cst_24 = arith.constant 0.000000e+00 : f32
    %68 = vector.broadcast %cst_23 : f32 to vector<8x3xf32>
    %69 = vector.broadcast %cst_24 : f32 to vector<8x3xf32>
    %70 = arith.select %67, %68, %69 : vector<8x3xi1>, vector<8x3xf32>
    %71 = arith.addf %59, %70 : vector<8x3xf32>
    %c2_i32_25 = arith.constant 2 : i32
    %72 = vector.broadcast %c2_i32_25 : i32 to vector<8x3xi32>
    %73 = arith.cmpi eq, %45, %72 : vector<8x3xi32>
    %c5_i32_26 = arith.constant 5 : i32
    %74 = vector.broadcast %c5_i32_26 : i32 to vector<8x3xi32>
    %75 = arith.cmpi sge, %46, %74 : vector<8x3xi32>
    %76 = arith.andi %73, %75 : vector<8x3xi1>
    %c8_i32_27 = arith.constant 8 : i32
    %77 = vector.broadcast %c8_i32_27 : i32 to vector<8x3xi32>
    %78 = arith.cmpi slt, %46, %77 : vector<8x3xi32>
    %79 = arith.andi %76, %78 : vector<8x3xi1>
    %cst_28 = arith.constant 0.333333343 : f32
    %cst_29 = arith.constant 0.000000e+00 : f32
    %80 = vector.broadcast %cst_28 : f32 to vector<8x3xf32>
    %81 = vector.broadcast %cst_29 : f32 to vector<8x3xf32>
    %82 = arith.select %79, %80, %81 : vector<8x3xi1>, vector<8x3xf32>
    %83 = arith.addf %71, %82 : vector<8x3xf32>
    %c0_30 = arith.constant 0 : index
    %c0_31 = arith.constant 0 : index
    %c0_32 = arith.constant 0 : index
    %84 = vector.load %arg3[%c0_30, %c0_31, %c0_32] : memref<1x1x8xf32, #tpu.memory_space<vmem>>, vector<1x1x8xf32>
    %85 = vector.shape_cast %84 : vector<1x1x8xf32> to vector<1x8xf32>
    %cst_33 = arith.constant dense<0.000000e+00> : vector<1x3xf32>
    %86 = tpu.matmul %85, %83, %cst_33 {dimension_numbers = #tpu.dot_dimension_numbers<[1], [0], [0], [1], [0, 0, 1, 1], [], []>} : vector<1x8xf32>, vector<8x3xf32>, vector<1x3xf32> -> vector<1x3xf32>
    %c0_34 = arith.constant 0 : index
    %c0_35 = arith.constant 0 : index
    %c0_36 = arith.constant 0 : index
    %87 = vector.load %arg5[%c0_34, %c0_35, %c0_36] : memref<1x1x3xf32, #tpu.memory_space<vmem>>, vector<1x1x3xf32>
    %88 = vector.shape_cast %87 : vector<1x1x3xf32> to vector<1x3xf32>
    %89 = vector.shape_cast %86 : vector<1x3xf32> to vector<1x1x3xf32>
    tpu.vector_store %arg5[%c0_34, %c0_35, %c0_36], %89 {strides = array<i32>} : memref<1x1x3xf32, #tpu.memory_space<vmem>>, vector<1x1x3xf32>,
    return
  }
  func.func @transform_0(%arg0: i32, %arg1: i32) -> (i32, i32, i32) {
    %c0_i32 = arith.constant 0 : i32
    %c0_i32_0 = arith.constant 0 : i32
    return %arg0, %c0_i32, %arg1 : i32, i32, i32
  }
  func.func @transform_1(%arg0: i32, %arg1: i32) -> (i32, i32, i32) {
    %c0_i32 = arith.constant 0 : i32
    %c0_i32_0 = arith.constant 0 : i32
    %c0_i32_1 = arith.constant 0 : i32
    return %arg0, %c0_i32, %c0_i32_0 : i32, i32, i32
  }
  func.func @transform_2(%arg0: i32, %arg1: i32) -> (i32, i32, i32) {
    %c0_i32 = arith.constant 0 : i32
    %c0_i32_0 = arith.constant 0 : i32
    return %arg0, %c0_i32, %arg1 : i32, i32, i32
  }
  func.func @transform_3(%arg0: i32, %arg1: i32) -> (i32, i32, i32) {
    %c0_i32 = arith.constant 0 : i32
    %c0_i32_0 = arith.constant 0 : i32
    %c0_i32_1 = arith.constant 0 : i32
    return %arg0, %c0_i32, %c0_i32_0 : i32, i32, i32
  }
}

</mosaic_0001>

<llo_original>
// kernel: tpu_custom_call.1
$region0: #{tpu_custom_call.1}
  #allocation0 [shape = 'u32[]', space=smem, size = 0x4, offset = 0x4, fixed_abs, tag = 'smem constant byte address 0x4 - core index']
  #allocation1 [shape = 'u32[72,128]{1,0:T(1,128)}', space=vmem, size = 0x9000, scoped, tag = 'internal scratch']
  %s0 = inlined_call_operand.hbm [shape: f32[2,8,256], index: 0, kind: input, shape index: {}]
  %s1 = inlined_call_operand.hbm [shape: f32[2,1,8], index: 1, kind: input, shape index: {}]
  %s2 = inlined_call_operand.vmem [shape: f32[2,3,256], index: 2, kind: output, shape index: {0}]
  %s3 = inlined_call_operand.hbm [shape: f32[2,1,3], index: 3, kind: output, shape index: {1}]
  %4 = xla_tuple %s2, %s3
  %s5 = sld [smem:[#allocation0]]
  $region57: #{tpu_custom_call.1} parent=0
    _
  %s7 = ssub.s32 1, %s5
  %s8 = scalar_select 0, %s7, %s5
  $region1: #{tpu_custom_call.1} parent=0
    #allocation2 [shape = 'u8[16384]{0}', space=vmem, size = 0x4000, scoped, tag = 'input window, operand 0']
    #allocation3 [shape = 's32[2]{0}', space=sflag, size = 0x8, scoped, tag = 'scoped memory for tpu_custom_call.1']
    #allocation4 [shape = 's32[2]{0}', space=sflag, size = 0x8, scoped, tag = 'scoped memory for tpu_custom_call.1']
    #allocation5 [shape = 'u8[1024]{0}', space=vmem, size = 0x400, scoped, tag = 'input window, operand 1']
    #allocation6 [shape = 's32[2]{0}', space=sflag, size = 0x8, scoped, tag = 'scoped memory for tpu_custom_call.1']
    #allocation7 [shape = 'u8[1024]{0}', space=vmem, size = 0x400, scoped, tag = 'output window, operand 1']
    %9 = vsyncpa [#allocation3], 0
    %s10 = scalar_lea.sflag [#allocation3], 1
    %11 = vsyncpa %s10, 0
    %12 = vsyncpa [#allocation6], 0
    %s13 = scalar_lea.sflag [#allocation6], 1
    %14 = vsyncpa %s13, 0
    %15 = vsyncpa [#allocation4], 0
    %s16 = scalar_lea.sflag [#allocation4], 1
    %17 = vsyncpa %s16, 0
    loop: start=0, step=1, limit=4
    $region2: #{tpu_custom_call.1} parent=1 // loop_pre_header
      _
    $region3: #{tpu_custom_call.1} parent=1 // loop_header
      %s19 = sphi 0, %s23
      %p20 = scmp.ge.s32.totalorder %s19, 4
      %s26 = sphi 0, %s38
      %s27 = sphi 0, %s34
      %s28 = sphi 0, %s26
      %s29 = sphi 0, %s27
      %s30 = sphi 0, %s28
      %s31 = sphi 0, %s29
      %s43 = sphi 0, %s45
      %s46 = sphi 0, %s43
      %s47 = sphi 0, %s46
      %s63 = sphi 0, %s47
      %s69 = sphi 0, %s71
      %s72 = sphi 0, %s69
      %s73 = sphi 0, %s72
      %s89 = sphi 0, %s73
      %s97 = sphi 0, %s99
      %s100 = sphi 0, %s97
      %s101 = sphi 0, %s100
      %s117 = sphi 0, %s101
      %s123 = sphi 0, %s125
      %s126 = sphi 0, %s123
      %s127 = sphi 0, %s126
      %s143 = sphi 0, %s127
    $region4: #{tpu_custom_call.1} parent=1 // loop_header_branch
      %22 = sbr.rel (%p20) target = $region8
    $region5: #{tpu_custom_call.1} parent=1 // loop_body
      %s24 = ssub.s32 %s19, 1
      %s25 = ssub.s32 %s19, 2
      %s32 = sadd.s32 1, %s27
      %p33 = scmp.ge.s32.totalorder %s32, 1
      %s34 = scalar_select %p33, 0, %s32
      %s35 = sadd.s32 1, %s26
      %s36 = scalar_select %p33, %s35, %s26
      %p37 = scmp.ge.s32.totalorder %s36, 2
      %s38 = scalar_select %p37, 0, %s36
      %s39 = ssub.s32 %s26, %s38
      %s40 = ssub.s32 %s27, %s34
      %s41 = sor.u32 %s39, %s40
      %p42 = scmp.eq.s32.totalorder %s41, 0
      %s44 = sadd.s32 %s43, 1
      %s45 = scalar_select %p42, %s43, %s44
      %p48 = pneg %p42
      %p49 = scmp.eq.s32.totalorder %s19, 1
      %p50 = por %p48, %p49
      %p51 = scmp.ne.s32.totalorder %s43, %s46
      %p52 = scmp.eq.s32.totalorder %s19, 0
      %p53 = por %p51, %p52
      %p54 = scmp.ne.s32.totalorder %s43, %s46
      %p55 = scmp.eq.s32.totalorder %s24, 1
      %p56 = por %p54, %p55
      %p57 = scmp.ne.s32.totalorder %s46, %s47
      %p58 = scmp.eq.s32.totalorder %s24, 0
      %p59 = por %p57, %p58
      %p60 = scmp.ne.s32.totalorder %s46, %s47
      %p61 = scmp.eq.s32.totalorder %s25, 1
      %p62 = por %p60, %p61
      %p64 = scmp.ne.s32.totalorder %s47, %s63
      %p65 = scmp.eq.s32.totalorder %s25, 0
      %p66 = por %p64, %p65
      %s67 = ssub.s32 %s26, %s38
      %p68 = scmp.eq.s32.totalorder %s67, 0
      %s70 = sadd.s32 %s69, 1
      %s71 = scalar_select %p68, %s69, %s70
      %p74 = pneg %p68
      %p75 = scmp.eq.s32.totalorder %s19, 1
      %p76 = por %p74, %p75
      %p77 = scmp.ne.s32.totalorder %s69, %s72
      %p78 = scmp.eq.s32.totalorder %s19, 0
      %p79 = por %p77, %p78
      %p80 = scmp.ne.s32.totalorder %s69, %s72
      %p81 = scmp.eq.s32.totalorder %s24, 1
      %p82 = por %p80, %p81
      %p83 = scmp.ne.s32.totalorder %s72, %s73
      %p84 = scmp.eq.s32.totalorder %s24, 0
      %p85 = por %p83, %p84
      %p86 = scmp.ne.s32.totalorder %s72, %s73
      %p87 = scmp.eq.s32.totalorder %s25, 1
      %p88 = por %p86, %p87
      %p90 = scmp.ne.s32.totalorder %s73, %s89
      %p91 = scmp.eq.s32.totalorder %s25, 0
      %p92 = por %p90, %p91
      %s93 = ssub.s32 %s26, %s38
      %s94 = ssub.s32 %s27, %s34
      %s95 = sor.u32 %s93, %s94
      %p96 = scmp.eq.s32.totalorder %s95, 0
      %s98 = sadd.s32 %s97, 1
      %s99 = scalar_select %p96, %s97, %s98
      %p102 = pneg %p96
      %p103 = scmp.eq.s32.totalorder %s19, 1
      %p104 = por %p102, %p103
      %p105 = scmp.ne.s32.totalorder %s97, %s100
      %p106 = scmp.eq.s32.totalorder %s19, 0
      %p107 = por %p105, %p106
      %p108 = scmp.ne.s32.totalorder %s97, %s100
      %p109 = scmp.eq.s32.totalorder %s24, 1
      %p110 = por %p108, %p109
      %p111 = scmp.ne.s32.totalorder %s100, %s101
      %p112 = scmp.eq.s32.totalorder %s24, 0
      %p113 = por %p111, %p112
      %p114 = scmp.ne.s32.totalorder %s100, %s101
      %p115 = scmp.eq.s32.totalorder %s25, 1
      %p116 = por %p114, %p115
      %p118 = scmp.ne.s32.totalorder %s101, %s117
      %p119 = scmp.eq.s32.totalorder %s25, 0
      %p120 = por %p118, %p119
      %s121 = ssub.s32 %s26, %s38
      %p122 = scmp.eq.s32.totalorder %s121, 0
      %s124 = sadd.s32 %s123, 1
      %s125 = scalar_select %p122, %s123, %s124
      %p128 = pneg %p122
      %p129 = scmp.eq.s32.totalorder %s19, 1
      %p130 = por %p128, %p129
      %p131 = scmp.ne.s32.totalorder %s123, %s126
      %p132 = scmp.eq.s32.totalorder %s19, 0
      %p133 = por %p131, %p132
      %p134 = scmp.ne.s32.totalorder %s123, %s126
      %p135 = scmp.eq.s32.totalorder %s24, 1
      %p136 = por %p134, %p135
      %p137 = scmp.ne.s32.totalorder %s126, %s127
      %p138 = scmp.eq.s32.totalorder %s24, 0
      %p139 = por %p137, %p138
      %p140 = scmp.ne.s32.totalorder %s126, %s127
      %p141 = scmp.eq.s32.totalorder %s25, 1
      %p142 = por %p140, %p141
      %p144 = scmp.ne.s32.totalorder %s127, %s143
      %p145 = scmp.eq.s32.totalorder %s25, 0
      %p146 = por %p144, %p145
      %p147 = scmp.le.s32.totalorder 1, %s19
      %p148 = scmp.lt.s32.totalorder %s19, 3
      %p149 = pnand %p147, %p148
      %p150 = pneg %p149
      // Predicated region
      $region9: #{tpu_custom_call.1} parent=5 // pred_check
        _
      $region10: #{tpu_custom_call.1} parent=5 // pred_check_branch
        %152 = sbr.rel (%p149) target = $region12
      $region11: #{tpu_custom_call.1} parent=5 // pred_region
        %s153 = ssub.s32 %s19, 1
      $region12: #{tpu_custom_call.1} parent=5 // pred_fallthru
        _
      %p154 = scmp.lt.s32.totalorder %s19, 2
      // Predicated region
      $region13: #{tpu_custom_call.1} parent=5 // pred_check
        %p155 = pneg %p154
      $region14: #{tpu_custom_call.1} parent=5 // pred_check_branch
        %157 = sbr.rel (%p155) target = $region16
      $region15: #{tpu_custom_call.1} parent=5 // pred_region
        // Predicated region
        $region17: #{tpu_custom_call.1} parent=15 // pred_check
          %p158 = pneg %p53
        $region18: #{tpu_custom_call.1} parent=15 // pred_check_branch
          %160 = sbr.rel (%p158) target = $region20
        $region19: #{tpu_custom_call.1} parent=15 // pred_region
          %s161 = sand.u32 %s43, 1
          %s162 = scalar_lea.sflag [#allocation3], %s161
          %s163 = sand.u32 %s43, 1
          %s164 = smul.addr %s163, 16
          %s165 = scalar_lea.vmem [#allocation2], %s164
          %s166 = smul.u32 2, %s27
          %168 = vsyncadd %s162, 0
          %s169 = smul.addr %s26, 2
          %s170 = sadd.s32 %s166, %s169
          %s171 = smul.addr %s170, 8
          %s172 = scalar_lea.hbm %s0, %s171
          %s174 = sshll.u32 %s172, 4
          %s175 = int_to_ptr.hbm [resolvable:$true] %s174
          %s176 = sshll.u32 %s165, 4
          %s177 = int_to_ptr.vmem [resolvable:$true] %s176
          %179 = dma.hbm_to_vmem [thread:$0]  %s175, 256, %s177, %s162
        $region20: #{tpu_custom_call.1} parent=15 // pred_fallthru
          _
        // Predicated region
        $region21: #{tpu_custom_call.1} parent=15 // pred_check
          %p180 = pneg %p79
        $region22: #{tpu_custom_call.1} parent=15 // pred_check_branch
          %182 = sbr.rel (%p180) target = $region24
        $region23: #{tpu_custom_call.1} parent=15 // pred_region
          %s183 = sand.u32 %s69, 1
          %s184 = scalar_lea.sflag [#allocation6], %s183
          %s185 = sand.u32 %s69, 1
          %s186 = scalar_lea.vmem [#allocation5], %s185
          %188 = vsyncadd %s184, 0
          %s189 = scalar_lea.hbm %s1, %s26
          %s191 = sshll.u32 %s189, 4
          %s192 = int_to_ptr.hbm [resolvable:$true] %s191
          %s193 = sshll.u32 %s186, 4
          %s194 = int_to_ptr.vmem [resolvable:$true] %s193
          %196 = dma.hbm_to_vmem [thread:$0]  %s192, 16, %s194, %s184
        $region24: #{tpu_custom_call.1} parent=15 // pred_fallthru
          _
      $region16: #{tpu_custom_call.1} parent=5 // pred_fallthru
        _
      %p197 = scmp.le.s32.totalorder 1, %s19
      %p198 = scmp.lt.s32.totalorder %s19, 3
      %p199 = pnand %p197, %p198
      %p200 = pneg %p199
      // Predicated region
      $region25: #{tpu_custom_call.1} parent=5 // pred_check
        _
      $region26: #{tpu_custom_call.1} parent=5 // pred_check_branch
        %202 = sbr.rel (%p199) target = $region28
      $region27: #{tpu_custom_call.1} parent=5 // pred_region
        %s203 = ssub.s32 %s19, 1
        %s204 = sand.u32 %s46, 1
        %s205 = scalar_lea.sflag [#allocation3], %s204
        %s206 = sand.u32 %s46, 1
        %s207 = smul.addr %s206, 16
        %s208 = scalar_lea.vmem [#allocation2], %s207
        // Predicated region
        $region29: #{tpu_custom_call.1} parent=27 // pred_check
          %p209 = pneg %p59
        $region30: #{tpu_custom_call.1} parent=27 // pred_check_branch
          %211 = sbr.rel (%p209) target = $region32
        $region31: #{tpu_custom_call.1} parent=27 // pred_region
          %213 = dma.done %s205, 256
        $region32: #{tpu_custom_call.1} parent=27 // pred_fallthru
          _
        %s214 = sand.u32 %s72, 1
        %s215 = scalar_lea.sflag [#allocation6], %s214
        %s216 = sand.u32 %s72, 1
        %s217 = scalar_lea.vmem [#allocation5], %s216
        // Predicated region
        $region33: #{tpu_custom_call.1} parent=27 // pred_check
          %p218 = pneg %p85
        $region34: #{tpu_custom_call.1} parent=27 // pred_check_branch
          %220 = sbr.rel (%p218) target = $region36
        $region35: #{tpu_custom_call.1} parent=27 // pred_region
          %222 = dma.done %s215, 16
        $region36: #{tpu_custom_call.1} parent=27 // pred_fallthru
          _
        %s223 = sand.u32 %s46, 1
        %s224 = scalar_lea.sflag [#allocation3], %s223
        %s225 = sand.u32 %s46, 1
        %s226 = smul.addr %s225, 16
        %s227 = scalar_lea.vmem [#allocation2], %s226
        %p228 = pneg %p59
        %p229 = pneg %p56
        %s230 = sand.u32 %s72, 1
        %s231 = scalar_lea.sflag [#allocation6], %s230
        %s232 = sand.u32 %s72, 1
        %s233 = scalar_lea.vmem [#allocation5], %s232
        %p234 = pneg %p85
        %p235 = pneg %p82
        %p236 = pneg %p113
        %p237 = pneg %p110
        %s238 = smul.u32 2, %s29
        %p239 = scmp.lt.s32.totalorder %s28, 1
        %s240 = scalar_select %p239, %s28, 1
        %p241 = scmp.lt.s32.totalorder %s238, 1
        %s242 = scalar_select %p241, %s238, 1
        %s243 = smul.addr %s240, 2
        %s244 = sadd.s32 %s242, %s243
        %s245 = smul.addr %s244, 4
        %s246 = scalar_lea.vmem %s2, %s245
        %p247 = pneg %p139
        %p248 = pneg %p136
        %s249 = sand.u32 %s126, 1
        %s250 = scalar_lea.sflag [#allocation4], %s249
        %s251 = sand.u32 %s126, 1
        %s252 = scalar_lea.vmem [#allocation7], %s251
        %s253 = smul.u32 2, %s29
        %s254 = smul.u32 2, %s29
        %p255 = scmp.lt.s32.totalorder %s28, 1
        %s256 = scalar_select %p255, %s28, 1
        %p257 = scmp.lt.s32.totalorder %s254, 1
        %s258 = scalar_select %p257, %s254, 1
        %s259 = smul.addr %s256, 2
        %s260 = sadd.s32 %s258, %s259
        %s261 = smul.addr %s260, 4
        %s262 = scalar_lea.vmem %s2, %s261
        %s263 = smul.u32 2, %s29
        %v264 = vlaneseq
        %v265 = vshrl.u32 %v264, 7
        %v266 = vlaneseq
        %v267 = vand.u32 %v266, 127
        %vm268 = vcmp.eq.s32.totalorder %v265, 0
        %vm269 = vcmp.ge.s32.totalorder %v267, 0
        %vm270 = vmand %vm268, %vm269
        %vm271 = vcmp.lt.s32.totalorder %v267, 3
        %vm272 = vmand %vm270, %vm271
        %v273 = vsel %vm272, 0.33333334, 0.0
        %v274 = vadd.f32 %v273, 0.0
        %vm275 = vcmp.eq.s32.totalorder %v265, 1
        %vm276 = vcmp.ge.s32.totalorder %v267, 2
        %vm277 = vmand %vm275, %vm276
        %vm278 = vcmp.lt.s32.totalorder %v267, 6
        %vm279 = vmand %vm277, %vm278
        %v280 = vsel %vm279, 0.25, 0.0
        %v281 = vadd.f32 %v274, %v280
        %vm282 = vcmp.eq.s32.totalorder %v265, 2
        %vm283 = vcmp.ge.s32.totalorder %v267, 5
        %vm284 = vmand %vm282, %vm283
        %vm285 = vcmp.lt.s32.totalorder %v267, 8
        %vm286 = vmand %vm284, %vm285
        %v287 = vsel %vm286, 0.33333334, 0.0
        %v288 = vadd.f32 %v281, %v287
        %v289 = vld [vmem:[%s208] sm:$0xff]
        %v290 = vld [vmem:[%s208 + $0x8] sm:$0xff]
        %vm291 = vcmask 64512
        %v293 = vsel %vm291, %v288, 0
        %295 = vmatpush.msra.mxu0 0.0
        %296 = vmatpush.msra.mxu0 0.0
        %297 = vmatpush.msra.mxu0 0.0
        %298 = vmatpush.msra.mxu0 0.0
        %299 = vmatpush.msra.mxu0 0.0
        %300 = vmatpush.msra.mxu0 0.0
        %301 = vmatpush.msra.mxu0 0.0
        %302 = vmatpush.msra.mxu0 0.0
        %303 = vmatpush.msra.mxu0 0.0
        %304 = vmatpush.msra.mxu0 0.0
        %305 = vmatpush.msra.mxu0 0.0
        %306 = vmatpush.msra.mxu0 0.0
        %307 = vmatpush.msra.mxu0 0.0
        %308 = vmatpush.msra.mxu0 0.0
        %309 = vmatpush.msra.mxu0 0.0
        %310 = vmatpush.msra.mxu0 %v289
        %311 = vmatmul.f32.gmra.mxu0 %v293
        %v312 = vpop.f32.mrf.mxu0
        %v313 = vadd.f32 0.0, %v312
        %314 = vdwg.mxu0
        %315 = vmatpush.msra.mxu0 0.0
        %316 = vmatpush.msra.mxu0 0.0
        %317 = vmatpush.msra.mxu0 0.0
        %318 = vmatpush.msra.mxu0 0.0
        %319 = vmatpush.msra.mxu0 0.0
        %320 = vmatpush.msra.mxu0 0.0
        %321 = vmatpush.msra.mxu0 0.0
        %322 = vmatpush.msra.mxu0 0.0
        %323 = vmatpush.msra.mxu0 0.0
        %324 = vmatpush.msra.mxu0 0.0
        %325 = vmatpush.msra.mxu0 0.0
        %326 = vmatpush.msra.mxu0 0.0
        %327 = vmatpush.msra.mxu0 0.0
        %328 = vmatpush.msra.mxu0 0.0
        %329 = vmatpush.msra.mxu0 0.0
        %330 = vmatpush.msra.mxu0 %v290
        %331 = vmatmul.f32.gmra.mxu0 %v293
        %v332 = vpop.f32.mrf.mxu0
        %v333 = vadd.f32 0.0, %v332
        %334 = vdwg.mxu0
        %v337 = vrot.slane %v333, 4
        %vm338 = vcmask 1043456
        %v339 = vsel %vm338, %v313, %v337
        %341 = vst [vmem:[%s262] sm:$0x77] %v339
        %vm342 = vcmp.eq.s32.totalorder %v267, 0
        %vm343 = vcmp.ge.s32.totalorder %v265, 0
        %vm344 = vmand %vm342, %vm343
        %vm345 = vcmp.lt.s32.totalorder %v265, 3
        %vm346 = vmand %vm344, %vm345
        %v347 = vsel %vm346, 0.33333334, 0.0
        %v348 = vadd.f32 %v347, 0.0
        %vm349 = vcmp.eq.s32.totalorder %v267, 1
        %vm350 = vcmp.ge.s32.totalorder %v265, 2
        %vm351 = vmand %vm349, %vm350
        %vm352 = vcmp.lt.s32.totalorder %v265, 6
        %vm353 = vmand %vm351, %vm352
        %v354 = vsel %vm353, 0.25, 0.0
        %v355 = vadd.f32 %v348, %v354
        %vm356 = vcmp.eq.s32.totalorder %v267, 2
        %vm357 = vcmp.ge.s32.totalorder %v265, 5
        %vm358 = vmand %vm356, %vm357
        %vm359 = vcmp.lt.s32.totalorder %v265, 8
        %vm360 = vmand %vm358, %vm359
        %v361 = vsel %vm360, 0.33333334, 0.0
        %v362 = vadd.f32 %v355, %v361
        %v363 = vld [vmem:[%s217] sm:$0x1]
        %v365 = vsel %vm291, %v363, 0
        %367 = vmatpush.msra.mxu0 0.0
        %368 = vmatpush.msra.mxu0 0.0
        %369 = vmatpush.msra.mxu0 0.0
        %370 = vmatpush.msra.mxu0 0.0
        %371 = vmatpush.msra.mxu0 0.0
        %372 = vmatpush.msra.mxu0 0.0
        %373 = vmatpush.msra.mxu0 0.0
        %374 = vmatpush.msra.mxu0 0.0
        %375 = vmatpush.msra.mxu0 0.0
        %376 = vmatpush.msra.mxu0 0.0
        %377 = vmatpush.msra.mxu0 0.0
        %378 = vmatpush.msra.mxu0 0.0
        %379 = vmatpush.msra.mxu0 0.0
        %380 = vmatpush.msra.mxu0 0.0
        %381 = vmatpush.msra.mxu0 0.0
        %382 = vmatpush.msra.mxu0 %v362
        %383 = vmatmul.f32.gmra.mxu0 %v365
        %v384 = vpop.f32.mrf.mxu0
        %v385 = vadd.f32 0.0, %v384
        %386 = vdwg.mxu0
        %vm387 = vcmask 16384
        %388 = vst.msk [vmem:[%s252] sm:$0x1] %vm387, %v385
        %s389 = smul.u32 2, %s29
        %p390 = scmp.lt.s32.totalorder %s28, 1
        %s391 = scalar_select %p390, %s28, 1
        %p392 = scmp.lt.s32.totalorder %s389, 1
        %s393 = scalar_select %p392, %s389, 1
        %s394 = smul.addr %s391, 2
        %s395 = sadd.s32 %s393, %s394
        %s396 = smul.addr %s395, 4
        %s397 = scalar_lea.vmem %s2, %s396
        %s398 = sand.u32 %s126, 1
        %s399 = scalar_lea.sflag [#allocation4], %s398
        %s400 = sand.u32 %s126, 1
        %s401 = scalar_lea.vmem [#allocation7], %s400
        // Predicated region
        $region37: #{tpu_custom_call.1} parent=27 // pred_check
          %p402 = pneg %p110
        $region38: #{tpu_custom_call.1} parent=27 // pred_check_branch
          %404 = sbr.rel (%p402) target = $region40
        $region39: #{tpu_custom_call.1} parent=27 // pred_region
          %s405 = smul.u32 2, %s29
        $region40: #{tpu_custom_call.1} parent=27 // pred_fallthru
          _
        // Predicated region
        $region41: #{tpu_custom_call.1} parent=27 // pred_check
          %p406 = pneg %p136
        $region42: #{tpu_custom_call.1} parent=27 // pred_check_branch
          %408 = sbr.rel (%p406) target = $region44
        $region43: #{tpu_custom_call.1} parent=27 // pred_region
          %410 = vsyncadd %s399, 0
          %s411 = scalar_lea.hbm %s3, %s28
          %s413 = sshll.u32 %s401, 4
          %s414 = int_to_ptr.vmem [resolvable:$true] %s413
          %s415 = sshll.u32 %s411, 4
          %s416 = int_to_ptr.hbm [resolvable:$true] %s415
          %418 = dma.vmem_to_hbm [thread:$0]  %s414, 16, %s416, %s399
        $region44: #{tpu_custom_call.1} parent=27 // pred_fallthru
          _
      $region28: #{tpu_custom_call.1} parent=5 // pred_fallthru
        _
      %p419 = scmp.le.s32.totalorder 2, %s19
      // Predicated region
      $region45: #{tpu_custom_call.1} parent=5 // pred_check
        %p420 = pneg %p419
      $region46: #{tpu_custom_call.1} parent=5 // pred_check_branch
        %422 = sbr.rel (%p420) target = $region48
      $region47: #{tpu_custom_call.1} parent=5 // pred_region
        %s423 = ssub.s32 %s19, 2
        // Predicated region
        $region49: #{tpu_custom_call.1} parent=47 // pred_check
          %p424 = pneg %p116
        $region50: #{tpu_custom_call.1} parent=47 // pred_check_branch
          %426 = sbr.rel (%p424) target = $region52
        $region51: #{tpu_custom_call.1} parent=47 // pred_region
          %s427 = smul.u32 2, %s31
          %p428 = scmp.lt.s32.totalorder %s30, 1
          %s429 = scalar_select %p428, %s30, 1
          %p430 = scmp.lt.s32.totalorder %s427, 1
          %s431 = scalar_select %p430, %s427, 1
          %s432 = smul.addr %s429, 2
          %s433 = sadd.s32 %s431, %s432
          %s434 = smul.addr %s433, 4
          %s435 = scalar_lea.vmem %s2, %s434
        $region52: #{tpu_custom_call.1} parent=47 // pred_fallthru
          _
        // Predicated region
        $region53: #{tpu_custom_call.1} parent=47 // pred_check
          %p436 = pneg %p142
        $region54: #{tpu_custom_call.1} parent=47 // pred_check_branch
          %438 = sbr.rel (%p436) target = $region56
        $region55: #{tpu_custom_call.1} parent=47 // pred_region
          %s439 = sand.u32 %s127, 1
          %s440 = scalar_lea.sflag [#allocation4], %s439
          %s441 = sand.u32 %s127, 1
          %s442 = scalar_lea.vmem [#allocation7], %s441
          %444 = dma.done %s440, 16
        $region56: #{tpu_custom_call.1} parent=47 // pred_fallthru
          _
      $region48: #{tpu_custom_call.1} parent=5 // pred_fallthru
        _
    $region6: #{tpu_custom_call.1} parent=1 // loop_footer
      %s23 = sadd.s32 1, %s19
    $region7: #{tpu_custom_call.1} parent=1 // loop_footer_branch
      %18 = sbr.rel target = $region3
    $region8: #{tpu_custom_call.1} parent=1 // loop_exit
      _
    %445 = vsyncpa [#allocation3], 1
    %s446 = scalar_lea.sflag [#allocation3], 1
    %447 = vsyncpa %s446, 1
    %448 = vsyncpa [#allocation6], 1
    %s449 = scalar_lea.sflag [#allocation6], 1
    %450 = vsyncpa %s449, 1
    %451 = vsyncpa [#allocation4], 1
    %s452 = scalar_lea.sflag [#allocation4], 1
    %453 = vsyncpa %s452, 1

</llo_original>
